<compile_context>
chip_gen: v7x
topology: tpu7x:2x2x1
jax: 0.10.0
libtpu: 0.0.40
codegen_flags: <defaults>
</compile_context>

<pallas_src>
import jax
import jax.numpy as jnp
from jax.experimental import pallas as pl
from jax.experimental.pallas import tpu as pltpu

LANE = 128
DEFAULT_TILE_B = 32768  # batch lanes per grid step (sweepable; 16K-64K is the sweet spot)


def _round_up(n, m):
    return ((n + m - 1) // m) * m


def _cdiv(a, b):
    return (a + b - 1) // b


def brain_kernel(x_ref, w1_ref, b1_ref, w2_ref, b2_ref, w3_ref, b3_ref, o_ref):
    """Fused 3-layer MLP in (features, batch) layout.

    x_ref : (inp, TILE_B) bf16/f32 -- batch on the lane axis (lane dense)
    w*_ref: (out_f, in_f) bf16     -- PyTorch weight layout, VMEM resident
    b*_ref: (out_f, 1)    f32      -- broadcast over the lane (batch) axis
    o_ref : (out, TILE_B)          -- lane-dense unmasked stores
    """
    x = x_ref[...]
    if x.dtype != jnp.bfloat16:  # static (trace-time) branch
        x = x.astype(jnp.bfloat16)

    # Layer 1: (h1, inp) @ (inp, TB) -> (h1, TB); f32 MXU accumulation,
    # bias-add + ReLU in f32 on the VPU.
    h = jnp.dot(w1_ref[...], x, preferred_element_type=jnp.float32) + b1_ref[...]
    h = jnp.maximum(h, 0.0).astype(jnp.bfloat16)

    # Layer 2
    h = jnp.dot(w2_ref[...], h, preferred_element_type=jnp.float32) + b2_ref[...]
    h = jnp.maximum(h, 0.0).astype(jnp.bfloat16)

    # Layer 3 (no activation)
    out = jnp.dot(w3_ref[...], h, preferred_element_type=jnp.float32) + b3_ref[...]
    o_ref[...] = out.astype(o_ref.dtype)


def _pick_tile_b(batch, tile_b):
    """Large tiles to amortize per-step overhead, but >=2 tiles when the batch
    allows it so v7x can shard the batch grid across both TensorCores."""
    b_ceil = _round_up(max(batch, 1), LANE)
    if b_ceil <= 2 * LANE:
        return b_ceil  # nothing worth splitting
    two_way = _round_up(_cdiv(b_ceil, 2), LANE)
    return max(LANE, min(tile_b, two_way))


def brain_forward_t(xt, params, *, tile_b=DEFAULT_TILE_B, out_dtype=jnp.float32):
    """Performance path: activations stay in (features, batch) layout.

    xt     : (inp, B) array (bf16 preferred; f32 also works, cast happens in-kernel).
    params : dict with w1,b1,w2,b2,w3,b3 (PyTorch layout, W: (out_f, in_f)).
    returns: (out, B) array of dtype `out_dtype`.
    """
    # No-op casts if params were created with init_brain_params (already bf16).
    w1 = params["w1"].astype(jnp.bfloat16)
    w2 = params["w2"].astype(jnp.bfloat16)
    w3 = params["w3"].astype(jnp.bfloat16)
    b1, b2, b3 = params["b1"], params["b2"], params["b3"]

    inp, batch = xt.shape
    h1 = w1.shape[0]
    h2 = w2.shape[0]
    out_dim = w3.shape[0]

    tb = _pick_tile_b(batch, tile_b)
    grid = (_cdiv(batch, tb),)  # ragged last tile is fine: OOB columns are dropped

    # Constant block index -> DMA'd once, stays VMEM resident across the grid.
    resident = lambda a: pl.BlockSpec(a.shape, lambda i: (0, 0))

    flops = 2 * batch * (inp * h1 + h1 * h2 + h2 * out_dim)
    bytes_accessed = int(
        xt.size * xt.dtype.itemsize
        + out_dim * batch * jnp.dtype(out_dtype).itemsize
        + sum(int(a.size) * a.dtype.itemsize for a in (w1, b1, w2, b2, w3, b3))
    )

    return pl.pallas_call(
        brain_kernel,
        out_shape=jax.ShapeDtypeStruct((out_dim, batch), out_dtype),
        grid=grid,
        in_specs=[
            pl.BlockSpec((inp, tb), lambda i: (0, i)),  # x: pipelined over batch tiles
            resident(w1), resident(b1),
            resident(w2), resident(b2),
            resident(w3), resident(b3),
        ],
        out_specs=pl.BlockSpec((out_dim, tb), lambda i: (0, i)),
        compiler_params=pltpu.CompilerParams(
            dimension_semantics=("parallel",),       # megacore sharding on v7x
            vmem_limit_bytes=48 * 1024 * 1024,       # headroom for large tiles (safe on v5e/v6e/v7x)
        ),
        cost_estimate=pl.CostEstimate(
            flops=flops, transcendentals=0, bytes_accessed=bytes_accessed),
    )(xt, w1, b1, w2, b2, w3, b3)


def brain_forward(x, params, *, tile_b=DEFAULT_TILE_B, out_dtype=jnp.float32):
    """PyTorch-interface adapter: x (B, inp) f32 -> (B, out), nn.Linear semantics
    (y = x @ W.T + b).  The bf16 cast rides on the single transpose pass.
    If the surrounding model can keep activations features-major, call
    brain_forward_t directly and skip both transposes entirely."""
    xt = jnp.transpose(x).astype(jnp.bfloat16)  # one fused pass: transpose + cast
    yt = brain_forward_t(xt, params, tile_b=tile_b, out_dtype=out_dtype)
    return jnp.transpose(yt)


def init_brain_params(key, inp, h1, h2, out):
    """nn.Linear init: U(-1/sqrt(fan_in), 1/sqrt(fan_in)); W is (out_f, in_f).
    Weights stored in bf16 (the matmul operand dtype, cast hoisted out of the
    forward call); biases stored f32 with shape (out_f, 1)."""
    ks = jax.random.split(key, 6)

    def lin(kw, kb, fan_in, fan_out):
        bound = 1.0 / jnp.sqrt(jnp.float32(fan_in))
        w = jax.random.uniform(kw, (fan_out, fan_in), jnp.float32, -bound, bound)
        b = jax.random.uniform(kb, (fan_out, 1), jnp.float32, -bound, bound)
        return w.astype(jnp.bfloat16), b

    w1, b1 = lin(ks[0], ks[1], inp, h1)
    w2, b2 = lin(ks[2], ks[3], h1, h2)
    w3, b3 = lin(ks[4], ks[5], h2, out)
    return {"w1": w1, "b1": b1, "w2": w2, "b2": b2, "w3": w3, "b3": b3}


def brain_reference_f32(x, p):
    """f32 math (the PyTorch module), using the stored weights upcast to f32."""
    w1, w2, w3 = (p[k].astype(jnp.float32) for k in ("w1", "w2", "w3"))
    h = jnp.maximum(x @ w1.T + p["b1"].T, 0.0)
    h = jnp.maximum(h @ w2.T + p["b2"].T, 0.0)
    return h @ w3.T + p["b3"].T


def brain_reference_bf16(x, p):
    """Reference mirroring the kernel's bf16-operand / f32-accumulate recipe."""
    bf, f32 = jnp.bfloat16, jnp.float32

    def lin(h, w, b):
        return jnp.dot(h.astype(bf), w.astype(bf).T, preferred_element_type=f32) + b.T

    h = jnp.maximum(lin(x, p["w1"], p["b1"]), 0.0)
    h = jnp.maximum(lin(h, p["w2"], p["b2"]), 0.0)
    return lin(h, p["w3"], p["b3"])


if __name__ == "__main__":
    # Brain(inputSize=16, h1=32, h2=32, outputSize=8, lr=...)
    inp, h1, h2, out = 16, 32, 32, 8
    batch = 300  # not a multiple of the tile: exercises a 2-step grid + ragged last tile

    key = jax.random.PRNGKey(0)
    k_x, k_p = jax.random.split(key)
    x = jax.random.normal(k_x, (batch, inp), jnp.float32)
    params = init_brain_params(k_p, inp, h1, h2, out)

    fwd = jax.jit(lambda xx: brain_forward(xx, params))
    y = fwd(x)
    jax.block_until_ready(y)

    assert y.shape == (batch, out)
    # Tight check against a reference using the same bf16-operand recipe.
    y_bf = brain_reference_bf16(x, params)
    assert jnp.allclose(y, y_bf, atol=5e-3, rtol=5e-3), float(jnp.max(jnp.abs(y - y_bf)))
    # Loose check against f32 math (PyTorch-equivalent modulo bf16 operand rounding).
    y_f32 = brain_reference_f32(x, params)
    assert jnp.allclose(y, y_f32, atol=5e-2, rtol=5e-2), float(jnp.max(jnp.abs(y - y_f32)))

    print("KERNEL_OK")
</pallas_src>

<mosaic_0001>
module attributes {stable_mosaic.version = 11 : i64} {
  func.func @brain_kernel(%arg0: i32, %arg1: memref<16x256xbf16, #tpu.memory_space<vmem>>, %arg2: memref<32x16xbf16, #tpu.memory_space<vmem>>, %arg3: memref<32x1xf32, #tpu.memory_space<vmem>>, %arg4: memref<32x32xbf16, #tpu.memory_space<vmem>>, %arg5: memref<32x1xf32, #tpu.memory_space<vmem>>, %arg6: memref<8x32xbf16, #tpu.memory_space<vmem>>, %arg7: memref<8x1xf32, #tpu.memory_space<vmem>>, %arg8: memref<8x256xf32, #tpu.memory_space<vmem>>) attributes {dimension_semantics = [#tpu.dimension_semantics<parallel>], iteration_bounds = array<i64: 2>, scalar_prefetch = 0 : i64, scratch_operands = 0 : i64, tpu.core_type = #tpu.core_type<tc>, window_params = [{transform_indices = @transform_0, window_bounds = array<i64: 16, 256>}, {pipeline_mode = #tpu.pipeline_mode<synchronous>, transform_indices = @transform_1, window_bounds = array<i64: 32, 16>}, {pipeline_mode = #tpu.pipeline_mode<synchronous>, transform_indices = @transform_2, window_bounds = array<i64: 32, 1>}, {pipeline_mode = #tpu.pipeline_mode<synchronous>, transform_indices = @transform_3, window_bounds = array<i64: 32, 32>}, {pipeline_mode = #tpu.pipeline_mode<synchronous>, transform_indices = @transform_4, window_bounds = array<i64: 32, 1>}, {pipeline_mode = #tpu.pipeline_mode<synchronous>, transform_indices = @transform_5, window_bounds = array<i64: 8, 32>}, {pipeline_mode = #tpu.pipeline_mode<synchronous>, transform_indices = @transform_6, window_bounds = array<i64: 8, 1>}, {transform_indices = @transform_7, window_bounds = array<i64: 8, 256>}]} {
    %c0 = arith.constant 0 : index
    %c0_0 = arith.constant 0 : index
    %0 = vector.load %arg1[%c0, %c0_0] : memref<16x256xbf16, #tpu.memory_space<vmem>>, vector<16x256xbf16>
    %c0_1 = arith.constant 0 : index
    %c0_2 = arith.constant 0 : index
    %1 = vector.load %arg2[%c0_1, %c0_2] : memref<32x16xbf16, #tpu.memory_space<vmem>>, vector<32x16xbf16>
    %cst = arith.constant dense<0.000000e+00> : vector<32x256xf32>
    %2 = tpu.matmul %1, %0, %cst {dimension_numbers = #tpu.dot_dimension_numbers<[1], [0], [0], [1], [0, 0, 1, 1], [], []>} : vector<32x16xbf16>, vector<16x256xbf16>, vector<32x256xf32> -> vector<32x256xf32>
    %c0_3 = arith.constant 0 : index
    %c0_4 = arith.constant 0 : index
    %3 = vector.load %arg3[%c0_3, %c0_4] : memref<32x1xf32, #tpu.memory_space<vmem>>, vector<32x1xf32>
    %4 = vector.broadcast %3 : vector<32x1xf32> to vector<32x256xf32>
    %5 = arith.addf %2, %4 : vector<32x256xf32>
    %cst_5 = arith.constant 0.000000e+00 : f32
    %6 = vector.broadcast %cst_5 : f32 to vector<32x256xf32>
    %7 = arith.maximumf %5, %6 : vector<32x256xf32>
    %8 = arith.truncf %7 : vector<32x256xf32> to vector<32x256xbf16>
    %c0_6 = arith.constant 0 : index
    %c0_7 = arith.constant 0 : index
    %9 = vector.load %arg4[%c0_6, %c0_7] : memref<32x32xbf16, #tpu.memory_space<vmem>>, vector<32x32xbf16>
    %cst_8 = arith.constant dense<0.000000e+00> : vector<32x256xf32>
    %10 = tpu.matmul %9, %8, %cst_8 {dimension_numbers = #tpu.dot_dimension_numbers<[1], [0], [0], [1], [0, 0, 1, 1], [], []>} : vector<32x32xbf16>, vector<32x256xbf16>, vector<32x256xf32> -> vector<32x256xf32>
    %c0_9 = arith.constant 0 : index
    %c0_10 = arith.constant 0 : index
    %11 = vector.load %arg5[%c0_9, %c0_10] : memref<32x1xf32, #tpu.memory_space<vmem>>, vector<32x1xf32>
    %12 = vector.broadcast %11 : vector<32x1xf32> to vector<32x256xf32>
    %13 = arith.addf %10, %12 : vector<32x256xf32>
    %cst_11 = arith.constant 0.000000e+00 : f32
    %14 = vector.broadcast %cst_11 : f32 to vector<32x256xf32>
    %15 = arith.maximumf %13, %14 : vector<32x256xf32>
    %16 = arith.truncf %15 : vector<32x256xf32> to vector<32x256xbf16>
    %c0_12 = arith.constant 0 : index
    %c0_13 = arith.constant 0 : index
    %17 = vector.load %arg6[%c0_12, %c0_13] : memref<8x32xbf16, #tpu.memory_space<vmem>>, vector<8x32xbf16>
    %cst_14 = arith.constant dense<0.000000e+00> : vector<8x256xf32>
    %18 = tpu.matmul %17, %16, %cst_14 {dimension_numbers = #tpu.dot_dimension_numbers<[1], [0], [0], [1], [0, 0, 1, 1], [], []>} : vector<8x32xbf16>, vector<32x256xbf16>, vector<8x256xf32> -> vector<8x256xf32>
    %c0_15 = arith.constant 0 : index
    %c0_16 = arith.constant 0 : index
    %19 = vector.load %arg7[%c0_15, %c0_16] : memref<8x1xf32, #tpu.memory_space<vmem>>, vector<8x1xf32>
    %20 = vector.broadcast %19 : vector<8x1xf32> to vector<8x256xf32>
    %21 = arith.addf %18, %20 : vector<8x256xf32>
    %c0_17 = arith.constant 0 : index
    %c0_18 = arith.constant 0 : index
    %22 = vector.load %arg8[%c0_17, %c0_18] : memref<8x256xf32, #tpu.memory_space<vmem>>, vector<8x256xf32>
    tpu.vector_store %arg8[%c0_17, %c0_18], %21 {strides = array<i32>} : memref<8x256xf32, #tpu.memory_space<vmem>>, vector<8x256xf32>,
    return
  }
  func.func @transform_0(%arg0: i32) -> (i32, i32) {
    %c0_i32 = arith.constant 0 : i32
    %c0_i32_0 = arith.constant 0 : i32
    return %c0_i32, %arg0 : i32, i32
  }
  func.func @transform_1(%arg0: i32) -> (i32, i32) {
    %c0_i32 = arith.constant 0 : i32
    %c0_i32_0 = arith.constant 0 : i32
    %c0_i32_1 = arith.constant 0 : i32
    return %c0_i32, %c0_i32_0 : i32, i32
  }
  func.func @transform_2(%arg0: i32) -> (i32, i32) {
    %c0_i32 = arith.constant 0 : i32
    %c0_i32_0 = arith.constant 0 : i32
    %c0_i32_1 = arith.constant 0 : i32
    return %c0_i32, %c0_i32_0 : i32, i32
  }
  func.func @transform_3(%arg0: i32) -> (i32, i32) {
    %c0_i32 = arith.constant 0 : i32
    %c0_i32_0 = arith.constant 0 : i32
    %c0_i32_1 = arith.constant 0 : i32
    return %c0_i32, %c0_i32_0 : i32, i32
  }
  func.func @transform_4(%arg0: i32) -> (i32, i32) {
    %c0_i32 = arith.constant 0 : i32
    %c0_i32_0 = arith.constant 0 : i32
    %c0_i32_1 = arith.constant 0 : i32
    return %c0_i32, %c0_i32_0 : i32, i32
  }
  func.func @transform_5(%arg0: i32) -> (i32, i32) {
    %c0_i32 = arith.constant 0 : i32
    %c0_i32_0 = arith.constant 0 : i32
    %c0_i32_1 = arith.constant 0 : i32
    return %c0_i32, %c0_i32_0 : i32, i32
  }
  func.func @transform_6(%arg0: i32) -> (i32, i32) {
    %c0_i32 = arith.constant 0 : i32
    %c0_i32_0 = arith.constant 0 : i32
    %c0_i32_1 = arith.constant 0 : i32
    return %c0_i32, %c0_i32_0 : i32, i32
  }
  func.func @transform_7(%arg0: i32) -> (i32, i32) {
    %c0_i32 = arith.constant 0 : i32
    %c0_i32_0 = arith.constant 0 : i32
    return %c0_i32, %arg0 : i32, i32
  }
}

</mosaic_0001>

<llo_original>
// kernel: _lambda_.1
$region0: #{_lambda_.1}
  #allocation0 [shape = 'u32[]', space=smem, size = 0x4, offset = 0x4, fixed_abs, tag = 'smem constant byte address 0x4 - core index']
  #allocation1 [shape = 'u32[144,128]{1,0:T(1,128)}', space=vmem, size = 0x12000, scoped, tag = 'internal scratch']
  %s0 = inlined_call_operand.vmem [shape: bf16[16,300], index: 0, kind: input, shape index: {}]
  %s1 = inlined_call_operand.vmem [shape: bf16[32,16], index: 1, kind: input, shape index: {}]
  %s2 = inlined_call_operand.vmem [shape: f32[32,1], index: 2, kind: input, shape index: {}]
  %s3 = inlined_call_operand.vmem [shape: bf16[32,32], index: 3, kind: input, shape index: {}]
  %s4 = inlined_call_operand.vmem [shape: f32[32,1], index: 4, kind: input, shape index: {}]
  %s5 = inlined_call_operand.hbm [shape: bf16[8,32], index: 5, kind: input, shape index: {}]
  %s6 = inlined_call_operand.hbm [shape: f32[8,1], index: 6, kind: input, shape index: {}]
  %s7 = inlined_call_operand.hbm [shape: f32[8,300], index: 7, kind: output, shape index: {}]
  %s8 = sld [smem:[#allocation0]]
  $region135: #{_lambda_.1} parent=0
    _
  %s10 = ssub.s32 1, %s8
  %s11 = scalar_select 0, %s10, %s8
  $region1: #{_lambda_.1} parent=0
    #allocation2 [shape = 'u8[16384]{0}', space=vmem, size = 0x4000, scoped, tag = 'input window, operand 0']
    #allocation3 [shape = 'u8[2048]{0}', space=vmem, size = 0x800, scoped, tag = 'input window, operand 5, single buffered']
    #allocation4 [shape = 's32[2]{0}', space=sflag, size = 0x8, scoped, tag = 'scoped memory for _lambda_.1']
    #allocation5 [shape = 's32[2]{0}', space=sflag, size = 0x8, scoped, tag = 'scoped memory for _lambda_.1']
    #allocation6 [shape = 'u8[4096]{0}', space=vmem, size = 0x1000, scoped, tag = 'input window, operand 6, single buffered']
    #allocation7 [shape = 's32[1]{0}', space=sflag, size = 0x4, scoped, tag = 'scoped memory for _lambda_.1']
    #allocation8 [shape = 'u8[16384]{0}', space=vmem, size = 0x4000, scoped, tag = 'output window, operand 0']
    %12 = vsyncpa [#allocation4], 0
    %13 = vsyncpa [#allocation7], 0
    %14 = vsyncpa [#allocation5], 0
    %s15 = scalar_lea.sflag [#allocation5], 1
    %16 = vsyncpa %s15, 0
    loop: start=0, step=1, limit=4
    $region2: #{_lambda_.1} parent=1 // loop_pre_header
      _
    $region3: #{_lambda_.1} parent=1 // loop_header
      %s18 = sphi 0, %s22
      %p19 = scmp.ge.s32.totalorder %s18, 4
      %s28 = sphi 0, %s30
      %s31 = sphi 0, %s28
      %s32 = sphi 0, %s31
      %s48 = sphi 0, %s32
      %s52 = sphi 0, %s52
      %s54 = sphi 0, %s52
      %s55 = sphi 0, %s54
      %s69 = sphi 0, %s55
      %s73 = sphi 0, %s73
      %s75 = sphi 0, %s73
      %s76 = sphi 0, %s75
      %s90 = sphi 0, %s76
      %s94 = sphi 0, %s94
      %s96 = sphi 0, %s94
      %s97 = sphi 0, %s96
      %s111 = sphi 0, %s97
      %s115 = sphi 0, %s115
      %s117 = sphi 0, %s115
      %s118 = sphi 0, %s117
      %s132 = sphi 0, %s118
      %s136 = sphi 0, %s136
      %s138 = sphi 0, %s136
      %s139 = sphi 0, %s138
      %s153 = sphi 0, %s139
      %s157 = sphi 0, %s157
      %s159 = sphi 0, %s157
      %s160 = sphi 0, %s159
      %s174 = sphi 0, %s160
      %s180 = sphi 0, %s182
      %s183 = sphi 0, %s180
      %s184 = sphi 0, %s183
      %s200 = sphi 0, %s184
    $region4: #{_lambda_.1} parent=1 // loop_header_branch
      %21 = sbr.rel (%p19) target = $region8
    $region5: #{_lambda_.1} parent=1 // loop_body
      %s23 = ssub.s32 %s18, 1
      %s24 = ssub.s32 %s18, 2
      %s25 = sadd.s32 %s18, 1
      %s26 = ssub.s32 %s18, %s25
      %p27 = scmp.eq.s32.totalorder %s26, 0
      %s29 = sadd.s32 %s28, 1
      %s30 = scalar_select %p27, %s28, %s29
      %p33 = pneg %p27
      %p34 = scmp.eq.s32.totalorder %s18, 1
      %p35 = por %p33, %p34
      %p36 = scmp.ne.s32.totalorder %s28, %s31
      %p37 = scmp.eq.s32.totalorder %s18, 0
      %p38 = por %p36, %p37
      %p39 = scmp.ne.s32.totalorder %s28, %s31
      %p40 = scmp.eq.s32.totalorder %s23, 1
      %p41 = por %p39, %p40
      %p42 = scmp.ne.s32.totalorder %s31, %s32
      %p43 = scmp.eq.s32.totalorder %s23, 0
      %p44 = por %p42, %p43
      %p45 = scmp.ne.s32.totalorder %s31, %s32
      %p46 = scmp.eq.s32.totalorder %s24, 1
      %p47 = por %p45, %p46
      %p49 = scmp.ne.s32.totalorder %s32, %s48
      %p50 = scmp.eq.s32.totalorder %s24, 0
      %p51 = por %p49, %p50
      %s53 = sadd.s32 %s52, 1
      %p56 = scmp.eq.s32.totalorder %s18, 1
      %p57 = scmp.ne.s32.totalorder %s52, %s54
      %p58 = scmp.eq.s32.totalorder %s18, 0
      %p59 = por %p57, %p58
      %p60 = scmp.ne.s32.totalorder %s52, %s54
      %p61 = scmp.eq.s32.totalorder %s23, 1
      %p62 = por %p60, %p61
      %p63 = scmp.ne.s32.totalorder %s54, %s55
      %p64 = scmp.eq.s32.totalorder %s23, 0
      %p65 = por %p63, %p64
      %p66 = scmp.ne.s32.totalorder %s54, %s55
      %p67 = scmp.eq.s32.totalorder %s24, 1
      %p68 = por %p66, %p67
      %p70 = scmp.ne.s32.totalorder %s55, %s69
      %p71 = scmp.eq.s32.totalorder %s24, 0
      %p72 = por %p70, %p71
      %s74 = sadd.s32 %s73, 1
      %p77 = scmp.eq.s32.totalorder %s18, 1
      %p78 = scmp.ne.s32.totalorder %s73, %s75
      %p79 = scmp.eq.s32.totalorder %s18, 0
      %p80 = por %p78, %p79
      %p81 = scmp.ne.s32.totalorder %s73, %s75
      %p82 = scmp.eq.s32.totalorder %s23, 1
      %p83 = por %p81, %p82
      %p84 = scmp.ne.s32.totalorder %s75, %s76
      %p85 = scmp.eq.s32.totalorder %s23, 0
      %p86 = por %p84, %p85
      %p87 = scmp.ne.s32.totalorder %s75, %s76
      %p88 = scmp.eq.s32.totalorder %s24, 1
      %p89 = por %p87, %p88
      %p91 = scmp.ne.s32.totalorder %s76, %s90
      %p92 = scmp.eq.s32.totalorder %s24, 0
      %p93 = por %p91, %p92
      %s95 = sadd.s32 %s94, 1
      %p98 = scmp.eq.s32.totalorder %s18, 1
      %p99 = scmp.ne.s32.totalorder %s94, %s96
      %p100 = scmp.eq.s32.totalorder %s18, 0
      %p101 = por %p99, %p100
      %p102 = scmp.ne.s32.totalorder %s94, %s96
      %p103 = scmp.eq.s32.totalorder %s23, 1
      %p104 = por %p102, %p103
      %p105 = scmp.ne.s32.totalorder %s96, %s97
      %p106 = scmp.eq.s32.totalorder %s23, 0
      %p107 = por %p105, %p106
      %p108 = scmp.ne.s32.totalorder %s96, %s97
      %p109 = scmp.eq.s32.totalorder %s24, 1
      %p110 = por %p108, %p109
      %p112 = scmp.ne.s32.totalorder %s97, %s111
      %p113 = scmp.eq.s32.totalorder %s24, 0
      %p114 = por %p112, %p113
      %s116 = sadd.s32 %s115, 1
      %p119 = scmp.eq.s32.totalorder %s18, 1
      %p120 = scmp.ne.s32.totalorder %s115, %s117
      %p121 = scmp.eq.s32.totalorder %s18, 0
      %p122 = por %p120, %p121
      %p123 = scmp.ne.s32.totalorder %s115, %s117
      %p124 = scmp.eq.s32.totalorder %s23, 1
      %p125 = por %p123, %p124
      %p126 = scmp.ne.s32.totalorder %s117, %s118
      %p127 = scmp.eq.s32.totalorder %s23, 0
      %p128 = por %p126, %p127
      %p129 = scmp.ne.s32.totalorder %s117, %s118
      %p130 = scmp.eq.s32.totalorder %s24, 1
      %p131 = por %p129, %p130
      %p133 = scmp.ne.s32.totalorder %s118, %s132
      %p134 = scmp.eq.s32.totalorder %s24, 0
      %p135 = por %p133, %p134
      %s137 = sadd.s32 %s136, 1
      %p140 = scmp.eq.s32.totalorder %s18, 1
      %p141 = scmp.ne.s32.totalorder %s136, %s138
      %p142 = scmp.eq.s32.totalorder %s18, 0
      %p143 = por %p141, %p142
      %p144 = scmp.ne.s32.totalorder %s136, %s138
      %p145 = scmp.eq.s32.totalorder %s23, 1
      %p146 = por %p144, %p145
      %p147 = scmp.ne.s32.totalorder %s138, %s139
      %p148 = scmp.eq.s32.totalorder %s23, 0
      %p149 = por %p147, %p148
      %p150 = scmp.ne.s32.totalorder %s138, %s139
      %p151 = scmp.eq.s32.totalorder %s24, 1
      %p152 = por %p150, %p151
      %p154 = scmp.ne.s32.totalorder %s139, %s153
      %p155 = scmp.eq.s32.totalorder %s24, 0
      %p156 = por %p154, %p155
      %s158 = sadd.s32 %s157, 1
      %p161 = scmp.eq.s32.totalorder %s18, 1
      %p162 = scmp.ne.s32.totalorder %s157, %s159
      %p163 = scmp.eq.s32.totalorder %s18, 0
      %p164 = por %p162, %p163
      %p165 = scmp.ne.s32.totalorder %s157, %s159
      %p166 = scmp.eq.s32.totalorder %s23, 1
      %p167 = por %p165, %p166
      %p168 = scmp.ne.s32.totalorder %s159, %s160
      %p169 = scmp.eq.s32.totalorder %s23, 0
      %p170 = por %p168, %p169
      %p171 = scmp.ne.s32.totalorder %s159, %s160
      %p172 = scmp.eq.s32.totalorder %s24, 1
      %p173 = por %p171, %p172
      %p175 = scmp.ne.s32.totalorder %s160, %s174
      %p176 = scmp.eq.s32.totalorder %s24, 0
      %p177 = por %p175, %p176
      %s178 = ssub.s32 %s18, %s25
      %p179 = scmp.eq.s32.totalorder %s178, 0
      %s181 = sadd.s32 %s180, 1
      %s182 = scalar_select %p179, %s180, %s181
      %p185 = pneg %p179
      %p186 = scmp.eq.s32.totalorder %s18, 1
      %p187 = por %p185, %p186
      %p188 = scmp.ne.s32.totalorder %s180, %s183
      %p189 = scmp.eq.s32.totalorder %s18, 0
      %p190 = por %p188, %p189
      %p191 = scmp.ne.s32.totalorder %s180, %s183
      %p192 = scmp.eq.s32.totalorder %s23, 1
      %p193 = por %p191, %p192
      %p194 = scmp.ne.s32.totalorder %s183, %s184
      %p195 = scmp.eq.s32.totalorder %s23, 0
      %p196 = por %p194, %p195
      %p197 = scmp.ne.s32.totalorder %s183, %s184
      %p198 = scmp.eq.s32.totalorder %s24, 1
      %p199 = por %p197, %p198
      %p201 = scmp.ne.s32.totalorder %s184, %s200
      %p202 = scmp.eq.s32.totalorder %s24, 0
      %p203 = por %p201, %p202
      %p204 = scmp.le.s32.totalorder 1, %s18
      %p205 = scmp.lt.s32.totalorder %s18, 3
      %p206 = pnand %p204, %p205
      %p207 = pneg %p206
      // Predicated region
      $region9: #{_lambda_.1} parent=5 // pred_check
        _
      $region10: #{_lambda_.1} parent=5 // pred_check_branch
        %209 = sbr.rel (%p206) target = $region12
      $region11: #{_lambda_.1} parent=5 // pred_region
        %s210 = ssub.s32 %s18, 1
        // Predicated region
        $region13: #{_lambda_.1} parent=11 // pred_check
          %p211 = pneg %p65
        $region14: #{_lambda_.1} parent=11 // pred_check_branch
          %213 = sbr.rel (%p211) target = $region16
        $region15: #{_lambda_.1} parent=11 // pred_region
          _
        $region16: #{_lambda_.1} parent=11 // pred_fallthru
          _
        // Predicated region
        $region17: #{_lambda_.1} parent=11 // pred_check
          %p214 = pneg %p86
        $region18: #{_lambda_.1} parent=11 // pred_check_branch
          %216 = sbr.rel (%p214) target = $region20
        $region19: #{_lambda_.1} parent=11 // pred_region
          _
        $region20: #{_lambda_.1} parent=11 // pred_fallthru
          _
        // Predicated region
        $region21: #{_lambda_.1} parent=11 // pred_check
          %p217 = pneg %p107
        $region22: #{_lambda_.1} parent=11 // pred_check_branch
          %219 = sbr.rel (%p217) target = $region24
        $region23: #{_lambda_.1} parent=11 // pred_region
          _
        $region24: #{_lambda_.1} parent=11 // pred_fallthru
          _
        // Predicated region
        $region25: #{_lambda_.1} parent=11 // pred_check
          %p220 = pneg %p128
        $region26: #{_lambda_.1} parent=11 // pred_check_branch
          %222 = sbr.rel (%p220) target = $region28
        $region27: #{_lambda_.1} parent=11 // pred_region
          _
        $region28: #{_lambda_.1} parent=11 // pred_fallthru
          _
        // Predicated region
        $region29: #{_lambda_.1} parent=11 // pred_check
          %p223 = pneg %p149
        $region30: #{_lambda_.1} parent=11 // pred_check_branch
          %225 = sbr.rel (%p223) target = $region32
        $region31: #{_lambda_.1} parent=11 // pred_region
          %s227 = ssub.s32 64, 64
          %228 = vsyncadd [#allocation4], %s227
          %s230 = sshll.u32 [#allocation3], 4
          %s231 = int_to_ptr.vmem [resolvable:$true] %s230
          %233 = dma.hbm_to_vmem [thread:$0]  %s5, 64, %s231, [#allocation4]
        $region32: #{_lambda_.1} parent=11 // pred_fallthru
          _
        // Predicated region
        $region33: #{_lambda_.1} parent=11 // pred_check
          %p234 = pneg %p170
        $region34: #{_lambda_.1} parent=11 // pred_check_branch
          %236 = sbr.rel (%p234) target = $region36
        $region35: #{_lambda_.1} parent=11 // pred_region
          %s238 = ssub.s32 128, 128
          %239 = vsyncadd [#allocation7], %s238
          %s241 = sshll.u32 [#allocation6], 4
          %s242 = int_to_ptr.vmem [resolvable:$true] %s241
          %244 = dma.hbm_to_vmem [thread:$0]  %s6, 128, %s242, [#allocation7]
        $region36: #{_lambda_.1} parent=11 // pred_fallthru
          _
      $region12: #{_lambda_.1} parent=5 // pred_fallthru
        _
      %p245 = scmp.lt.s32.totalorder %s18, 2
      // Predicated region
      $region37: #{_lambda_.1} parent=5 // pred_check
        %p246 = pneg %p245
      $region38: #{_lambda_.1} parent=5 // pred_check_branch
        %248 = sbr.rel (%p246) target = $region40
      $region39: #{_lambda_.1} parent=5 // pred_region
        // Predicated region
        $region41: #{_lambda_.1} parent=39 // pred_check
          %p249 = pneg %p38
        $region42: #{_lambda_.1} parent=39 // pred_check_branch
          %251 = sbr.rel (%p249) target = $region44
        $region43: #{_lambda_.1} parent=39 // pred_region
          %s252 = sand.u32 %s28, 1
          %s253 = sand.u32 %s28, 1
          %s254 = smul.addr %s253, 16
          %s255 = scalar_lea.vmem [#allocation2], %s254
          %s256 = smul.u32 2, %s18
          %s257 = ssub.s32 3, %s256
          %p258 = scmp.lt.s32.totalorder %s257, 2
          %s259 = scalar_select %p258, %s257, 2
          %s260 = smul.u32 128, %s259
          %p261 = scmp.ne.s32.totalorder 0, %s260
          %s262 = smul.addr %s256, 4
          %s263 = scalar_lea.vmem %s0, %s262
          %s264 = smul.u32 %s259, 4
          // Predicated region
          $region45: #{_lambda_.1} parent=43 // pred_check
            %p265 = pneg %p261
          $region46: #{_lambda_.1} parent=43 // pred_check_branch
            %267 = sbr.rel (%p265) target = $region48
          $region47: #{_lambda_.1} parent=43 // pred_region
            %p268 = scmp.lt.u32.totalorder %s264, 8
            %p269 = pneg %p268
            // Predicated region
            $region49: #{_lambda_.1} parent=47 // pred_check
              _
            $region50: #{_lambda_.1} parent=47 // pred_check_branch
              %271 = sbr.rel (%p268) target = $region52
            $region51: #{_lambda_.1} parent=47 // pred_region
              %s288 = sand.u32 %s264, 7
              %p289 = scmp.eq.s32.totalorder %s288, 0
              // Predicated region
              $region64: #{_lambda_.1} parent=51 // pred_check
                %p290 = pneg %p289
              $region65: #{_lambda_.1} parent=51 // pred_check_branch
                %292 = sbr.rel (%p290) target = $region67
              $region66: #{_lambda_.1} parent=51 // pred_region
                %s293 = sshrl.u32 %s264, 3
                %s294 = sshrl.u32 %s293, 5
                // While loop
                $region68: #{_lambda_.1} parent=66 // loop_pre_header
                  _
                $region69: #{_lambda_.1} parent=66 // loop_header
                  %s298 = sphi 0, %s300
                  %p299 = scmp.ge.s32.totalorder %s298, %s294
                  %s303 = sphi 0, %s436
                  %s304 = sphi %s263, %s439
                  %s305 = sphi %s255, %s440
                $region70: #{_lambda_.1} parent=66 // loop_header_branch
                  %302 = sbr.rel (%p299) target = $region74
                $region71: #{_lambda_.1} parent=66 // loop_body
                  %v306 = vld [vmem:[%s304] sm:$0xff]
                  %307 = vst [vmem:[%s305] sm:$0xff] %v306
                  %v308 = vld [vmem:[%s304 + $0x8] sm:$0xff]
                  %309 = vst [vmem:[%s305 + $0x8] sm:$0xff] %v308
                  %v310 = vld [vmem:[%s304 + $0x10] sm:$0xff]
                  %311 = vst [vmem:[%s305 + $0x10] sm:$0xff] %v310
                  %v312 = vld [vmem:[%s304 + $0x18] sm:$0xff]
                  %313 = vst [vmem:[%s305 + $0x18] sm:$0xff] %v312
                  %v314 = vld [vmem:[%s304 + $0x20] sm:$0xff]
                  %315 = vst [vmem:[%s305 + $0x20] sm:$0xff] %v314
                  %v316 = vld [vmem:[%s304 + $0x28] sm:$0xff]
                  %317 = vst [vmem:[%s305 + $0x28] sm:$0xff] %v316
                  %v318 = vld [vmem:[%s304 + $0x30] sm:$0xff]
                  %319 = vst [vmem:[%s305 + $0x30] sm:$0xff] %v318
                  %v320 = vld [vmem:[%s304 + $0x38] sm:$0xff]
                  %321 = vst [vmem:[%s305 + $0x38] sm:$0xff] %v320
                  %v322 = vld [vmem:[%s304 + $0x40] sm:$0xff]
                  %323 = vst [vmem:[%s305 + $0x40] sm:$0xff] %v322
                  %v324 = vld [vmem:[%s304 + $0x48] sm:$0xff]
                  %325 = vst [vmem:[%s305 + $0x48] sm:$0xff] %v324
                  %v326 = vld [vmem:[%s304 + $0x50] sm:$0xff]
                  %327 = vst [vmem:[%s305 + $0x50] sm:$0xff] %v326
                  %v328 = vld [vmem:[%s304 + $0x58] sm:$0xff]
                  %329 = vst [vmem:[%s305 + $0x58] sm:$0xff] %v328
                  %v330 = vld [vmem:[%s304 + $0x60] sm:$0xff]
                  %331 = vst [vmem:[%s305 + $0x60] sm:$0xff] %v330
                  %v332 = vld [vmem:[%s304 + $0x68] sm:$0xff]
                  %333 = vst [vmem:[%s305 + $0x68] sm:$0xff] %v332
                  %v334 = vld [vmem:[%s304 + $0x70] sm:$0xff]
                  %335 = vst [vmem:[%s305 + $0x70] sm:$0xff] %v334
                  %v336 = vld [vmem:[%s304 + $0x78] sm:$0xff]
                  %337 = vst [vmem:[%s305 + $0x78] sm:$0xff] %v336
                  %v338 = vld [vmem:[%s304 + $0x80] sm:$0xff]
                  %339 = vst [vmem:[%s305 + $0x80] sm:$0xff] %v338
                  %v340 = vld [vmem:[%s304 + $0x88] sm:$0xff]
                  %341 = vst [vmem:[%s305 + $0x88] sm:$0xff] %v340
                  %v342 = vld [vmem:[%s304 + $0x90] sm:$0xff]
                  %343 = vst [vmem:[%s305 + $0x90] sm:$0xff] %v342
                  %v344 = vld [vmem:[%s304 + $0x98] sm:$0xff]
                  %345 = vst [vmem:[%s305 + $0x98] sm:$0xff] %v344
                  %v346 = vld [vmem:[%s304 + $0xa0] sm:$0xff]
                  %347 = vst [vmem:[%s305 + $0xa0] sm:$0xff] %v346
                  %v348 = vld [vmem:[%s304 + $0xa8] sm:$0xff]
                  %349 = vst [vmem:[%s305 + $0xa8] sm:$0xff] %v348
                  %v350 = vld [vmem:[%s304 + $0xb0] sm:$0xff]
                  %351 = vst [vmem:[%s305 + $0xb0] sm:$0xff] %v350
                  %v352 = vld [vmem:[%s304 + $0xb8] sm:$0xff]
                  %353 = vst [vmem:[%s305 + $0xb8] sm:$0xff] %v352
                  %v354 = vld [vmem:[%s304 + $0xc0] sm:$0xff]
                  %355 = vst [vmem:[%s305 + $0xc0] sm:$0xff] %v354
                  %v356 = vld [vmem:[%s304 + $0xc8] sm:$0xff]
                  %357 = vst [vmem:[%s305 + $0xc8] sm:$0xff] %v356
                  %v358 = vld [vmem:[%s304 + $0xd0] sm:$0xff]
                  %359 = vst [vmem:[%s305 + $0xd0] sm:$0xff] %v358
                  %v360 = vld [vmem:[%s304 + $0xd8] sm:$0xff]
                  %361 = vst [vmem:[%s305 + $0xd8] sm:$0xff] %v360
                  %v362 = vld [vmem:[%s304 + $0xe0] sm:$0xff]
                  %363 = vst [vmem:[%s305 + $0xe0] sm:$0xff] %v362
                  %v364 = vld [vmem:[%s304 + $0xe8] sm:$0xff]
                  %365 = vst [vmem:[%s305 + $0xe8] sm:$0xff] %v364
                  %v366 = vld [vmem:[%s304 + $0xf0] sm:$0xff]
                  %367 = vst [vmem:[%s305 + $0xf0] sm:$0xff] %v366
                  %v368 = vld [vmem:[%s304 + $0xf8] sm:$0xff]
                  %369 = vst [vmem:[%s305 + $0xf8] sm:$0xff] %v368
                  %v370 = vld [vmem:[%s304 + $0xc] sm:$0xff]
                  %371 = vst [vmem:[%s305 + $0x8] sm:$0xff] %v370
                  %v372 = vld [vmem:[%s304 + $0x14] sm:$0xff]
                  %373 = vst [vmem:[%s305 + $0x10] sm:$0xff] %v372
                  %v374 = vld [vmem:[%s304 + $0x1c] sm:$0xff]
                  %375 = vst [vmem:[%s305 + $0x18] sm:$0xff] %v374
                  %v376 = vld [vmem:[%s304 + $0x24] sm:$0xff]
                  %377 = vst [vmem:[%s305 + $0x20] sm:$0xff] %v376
                  %v378 = vld [vmem:[%s304 + $0x2c] sm:$0xff]
                  %379 = vst [vmem:[%s305 + $0x28] sm:$0xff] %v378
                  %v380 = vld [vmem:[%s304 + $0x34] sm:$0xff]
                  %381 = vst [vmem:[%s305 + $0x30] sm:$0xff] %v380
                  %v382 = vld [vmem:[%s304 + $0x3c] sm:$0xff]
                  %383 = vst [vmem:[%s305 + $0x38] sm:$0xff] %v382
                  %v384 = vld [vmem:[%s304 + $0x44] sm:$0xff]
                  %385 = vst [vmem:[%s305 + $0x40] sm:$0xff] %v384
                  %v386 = vld [vmem:[%s304 + $0x4c] sm:$0xff]
                  %387 = vst [vmem:[%s305 + $0x48] sm:$0xff] %v386
                  %v388 = vld [vmem:[%s304 + $0x54] sm:$0xff]
                  %389 = vst [vmem:[%s305 + $0x50] sm:$0xff] %v388
                  %v390 = vld [vmem:[%s304 + $0x5c] sm:$0xff]
                  %391 = vst [vmem:[%s305 + $0x58] sm:$0xff] %v390
                  %v392 = vld [vmem:[%s304 + $0x64] sm:$0xff]
                  %393 = vst [vmem:[%s305 + $0x60] sm:$0xff] %v392
                  %v394 = vld [vmem:[%s304 + $0x6c] sm:$0xff]
                  %395 = vst [vmem:[%s305 + $0x68] sm:$0xff] %v394
                  %v396 = vld [vmem:[%s304 + $0x74] sm:$0xff]
                  %397 = vst [vmem:[%s305 + $0x70] sm:$0xff] %v396
                  %v398 = vld [vmem:[%s304 + $0x7c] sm:$0xff]
                  %399 = vst [vmem:[%s305 + $0x78] sm:$0xff] %v398
                  %v400 = vld [vmem:[%s304 + $0x84] sm:$0xff]
                  %401 = vst [vmem:[%s305 + $0x80] sm:$0xff] %v400
                  %v402 = vld [vmem:[%s304 + $0x8c] sm:$0xff]
                  %403 = vst [vmem:[%s305 + $0x88] sm:$0xff] %v402
                  %v404 = vld [vmem:[%s304 + $0x94] sm:$0xff]
                  %405 = vst [vmem:[%s305 + $0x90] sm:$0xff] %v404
                  %v406 = vld [vmem:[%s304 + $0x9c] sm:$0xff]
                  %407 = vst [vmem:[%s305 + $0x98] sm:$0xff] %v406
                  %v408 = vld [vmem:[%s304 + $0xa4] sm:$0xff]
                  %409 = vst [vmem:[%s305 + $0xa0] sm:$0xff] %v408
                  %v410 = vld [vmem:[%s304 + $0xac] sm:$0xff]
                  %411 = vst [vmem:[%s305 + $0xa8] sm:$0xff] %v410
                  %v412 = vld [vmem:[%s304 + $0xb4] sm:$0xff]
                  %413 = vst [vmem:[%s305 + $0xb0] sm:$0xff] %v412
                  %v414 = vld [vmem:[%s304 + $0xbc] sm:$0xff]
                  %415 = vst [vmem:[%s305 + $0xb8] sm:$0xff] %v414
                  %v416 = vld [vmem:[%s304 + $0xc4] sm:$0xff]
                  %417 = vst [vmem:[%s305 + $0xc0] sm:$0xff] %v416
                  %v418 = vld [vmem:[%s304 + $0xcc] sm:$0xff]
                  %419 = vst [vmem:[%s305 + $0xc8] sm:$0xff] %v418
                  %v420 = vld [vmem:[%s304 + $0xd4] sm:$0xff]
                  %421 = vst [vmem:[%s305 + $0xd0] sm:$0xff] %v420
                  %v422 = vld [vmem:[%s304 + $0xdc] sm:$0xff]
                  %423 = vst [vmem:[%s305 + $0xd8] sm:$0xff] %v422
                  %v424 = vld [vmem:[%s304 + $0xe4] sm:$0xff]
                  %425 = vst [vmem:[%s305 + $0xe0] sm:$0xff] %v424
                  %v426 = vld [vmem:[%s304 + $0xec] sm:$0xff]
                  %427 = vst [vmem:[%s305 + $0xe8] sm:$0xff] %v426
                  %v428 = vld [vmem:[%s304 + $0xf4] sm:$0xff]
                  %429 = vst [vmem:[%s305 + $0xf0] sm:$0xff] %v428
                  %v430 = vld [vmem:[%s304 + $0xfc] sm:$0xff]
                  %431 = vst [vmem:[%s305 + $0xf8] sm:$0xff] %v430
                  %v432 = vld [vmem:[%s304 + $0x104] sm:$0xff]
                  %433 = vst [vmem:[%s305 + $0x100] sm:$0xff] %v432
                  %s434 = sadd.s32 1, %s303
                  %p435 = scmp.ge.s32.totalorder %s434, %s294
                  %s436 = scalar_select %p435, 0, %s434
                  %s437 = smul.u32 %s436, 256
                  %s438 = smul.u32 %s436, 256
                  %s439 = scalar_lea.vmem %s263, %s437
                  %s440 = scalar_lea.vmem %s255, %s438 [#allocation2]
                $region72: #{_lambda_.1} parent=66 // loop_footer
                  %s300 = sadd.s32 %s298, 1
                $region73: #{_lambda_.1} parent=66 // loop_footer_branch
                  %297 = sbr.rel target = $region69
                $region74: #{_lambda_.1} parent=66 // loop_exit
                  _
                %s441 = sshrl.u32 %s293, 5
                %s442 = sand.u32 %s293, 31
                %s443 = smul.u32 %s441, 32
                %s444 = smul.u32 128, %s443
                %s445 = sshra.s32 %s444, 4
                %s446 = scalar_lea.vmem %s263, %s445
                %s447 = smul.u32 128, %s443
                %s448 = sshra.s32 %s447, 4
                %s449 = scalar_lea.vmem %s255, %s448 [#allocation2]
                // While loop
                $region75: #{_lambda_.1} parent=66 // loop_pre_header
                  _
                $region76: #{_lambda_.1} parent=66 // loop_header
                  %s453 = sphi 0, %s455
                  %p454 = scmp.ge.s32.totalorder %s453, %s442
                  %s458 = sphi 0, %s467
                  %s459 = sphi %s446, %s470
                  %s460 = sphi %s449, %s471
                $region77: #{_lambda_.1} parent=66 // loop_header_branch
                  %457 = sbr.rel (%p454) target = $region81
                $region78: #{_lambda_.1} parent=66 // loop_body
                  %v461 = vld [vmem:[%s459] sm:$0xff]
                  %462 = vst [vmem:[%s460] sm:$0xff] %v461
                  %v463 = vld [vmem:[%s459 + $0xc] sm:$0xff]
                  %464 = vst [vmem:[%s460 + $0x8] sm:$0xff] %v463
                  %s465 = sadd.s32 1, %s458
                  %p466 = scmp.ge.s32.totalorder %s465, %s442
                  %s467 = scalar_select %p466, 0, %s465
                  %s468 = smul.u32 %s467, 8
                  %s469 = smul.u32 %s467, 8
                  %s470 = scalar_lea.vmem %s446, %s468
                  %s471 = scalar_lea.vmem %s449, %s469 [#allocation2]
                $region79: #{_lambda_.1} parent=66 // loop_footer
                  %s455 = sadd.s32 %s453, 1
                $region80: #{_lambda_.1} parent=66 // loop_footer_branch
                  %452 = sbr.rel target = $region76
                $region81: #{_lambda_.1} parent=66 // loop_exit
                  _
              $region67: #{_lambda_.1} parent=51 // pred_fallthru
                _
              %p472 = pneg %p289
              // Predicated region
              $region82: #{_lambda_.1} parent=51 // pred_check
                _
              $region83: #{_lambda_.1} parent=51 // pred_check_branch
                %474 = sbr.rel (%p289) target = $region85
              $region84: #{_lambda_.1} parent=51 // pred_region
                %s475 = sand.u32 %s264, 7
                %s476 = ssub.s32 %s264, %s475
                %s477 = scalar_lea.vmem %s263, %s476
                %s478 = ssub.s32 %s264, %s475
                %s479 = scalar_lea.vmem %s255, %s478 [#allocation2]
                %s480 = sshrl.u32 %s264, 3
                %s481 = sshrl.u32 %s480, 5
                // While loop
                $region86: #{_lambda_.1} parent=84 // loop_pre_header
                  _
                $region87: #{_lambda_.1} parent=84 // loop_header
                  %s485 = sphi 0, %s487
                  %p486 = scmp.ge.s32.totalorder %s485, %s481
                  %s490 = sphi 0, %s623
                  %s491 = sphi %s263, %s626
                  %s492 = sphi %s255, %s627
                $region88: #{_lambda_.1} parent=84 // loop_header_branch
                  %489 = sbr.rel (%p486) target = $region92
                $region89: #{_lambda_.1} parent=84 // loop_body
                  %v493 = vld [vmem:[%s491] sm:$0xff]
                  %494 = vst [vmem:[%s492] sm:$0xff] %v493
                  %v495 = vld [vmem:[%s491 + $0x8] sm:$0xff]
                  %496 = vst [vmem:[%s492 + $0x8] sm:$0xff] %v495
                  %v497 = vld [vmem:[%s491 + $0x10] sm:$0xff]
                  %498 = vst [vmem:[%s492 + $0x10] sm:$0xff] %v497
                  %v499 = vld [vmem:[%s491 + $0x18] sm:$0xff]
                  %500 = vst [vmem:[%s492 + $0x18] sm:$0xff] %v499
                  %v501 = vld [vmem:[%s491 + $0x20] sm:$0xff]
                  %502 = vst [vmem:[%s492 + $0x20] sm:$0xff] %v501
                  %v503 = vld [vmem:[%s491 + $0x28] sm:$0xff]
                  %504 = vst [vmem:[%s492 + $0x28] sm:$0xff] %v503
                  %v505 = vld [vmem:[%s491 + $0x30] sm:$0xff]
                  %506 = vst [vmem:[%s492 + $0x30] sm:$0xff] %v505
                  %v507 = vld [vmem:[%s491 + $0x38] sm:$0xff]
                  %508 = vst [vmem:[%s492 + $0x38] sm:$0xff] %v507
                  %v509 = vld [vmem:[%s491 + $0x40] sm:$0xff]
                  %510 = vst [vmem:[%s492 + $0x40] sm:$0xff] %v509
                  %v511 = vld [vmem:[%s491 + $0x48] sm:$0xff]
                  %512 = vst [vmem:[%s492 + $0x48] sm:$0xff] %v511
                  %v513 = vld [vmem:[%s491 + $0x50] sm:$0xff]
                  %514 = vst [vmem:[%s492 + $0x50] sm:$0xff] %v513
                  %v515 = vld [vmem:[%s491 + $0x58] sm:$0xff]
                  %516 = vst [vmem:[%s492 + $0x58] sm:$0xff] %v515
                  %v517 = vld [vmem:[%s491 + $0x60] sm:$0xff]
                  %518 = vst [vmem:[%s492 + $0x60] sm:$0xff] %v517
                  %v519 = vld [vmem:[%s491 + $0x68] sm:$0xff]
                  %520 = vst [vmem:[%s492 + $0x68] sm:$0xff] %v519
                  %v521 = vld [vmem:[%s491 + $0x70] sm:$0xff]
                  %522 = vst [vmem:[%s492 + $0x70] sm:$0xff] %v521
                  %v523 = vld [vmem:[%s491 + $0x78] sm:$0xff]
                  %524 = vst [vmem:[%s492 + $0x78] sm:$0xff] %v523
                  %v525 = vld [vmem:[%s491 + $0x80] sm:$0xff]
                  %526 = vst [vmem:[%s492 + $0x80] sm:$0xff] %v525
                  %v527 = vld [vmem:[%s491 + $0x88] sm:$0xff]
                  %528 = vst [vmem:[%s492 + $0x88] sm:$0xff] %v527
                  %v529 = vld [vmem:[%s491 + $0x90] sm:$0xff]
                  %530 = vst [vmem:[%s492 + $0x90] sm:$0xff] %v529
                  %v531 = vld [vmem:[%s491 + $0x98] sm:$0xff]
                  %532 = vst [vmem:[%s492 + $0x98] sm:$0xff] %v531
                  %v533 = vld [vmem:[%s491 + $0xa0] sm:$0xff]
                  %534 = vst [vmem:[%s492 + $0xa0] sm:$0xff] %v533
                  %v535 = vld [vmem:[%s491 + $0xa8] sm:$0xff]
                  %536 = vst [vmem:[%s492 + $0xa8] sm:$0xff] %v535
                  %v537 = vld [vmem:[%s491 + $0xb0] sm:$0xff]
                  %538 = vst [vmem:[%s492 + $0xb0] sm:$0xff] %v537
                  %v539 = vld [vmem:[%s491 + $0xb8] sm:$0xff]
                  %540 = vst [vmem:[%s492 + $0xb8] sm:$0xff] %v539
                  %v541 = vld [vmem:[%s491 + $0xc0] sm:$0xff]
                  %542 = vst [vmem:[%s492 + $0xc0] sm:$0xff] %v541
                  %v543 = vld [vmem:[%s491 + $0xc8] sm:$0xff]
                  %544 = vst [vmem:[%s492 + $0xc8] sm:$0xff] %v543
                  %v545 = vld [vmem:[%s491 + $0xd0] sm:$0xff]
                  %546 = vst [vmem:[%s492 + $0xd0] sm:$0xff] %v545
                  %v547 = vld [vmem:[%s491 + $0xd8] sm:$0xff]
                  %548 = vst [vmem:[%s492 + $0xd8] sm:$0xff] %v547
                  %v549 = vld [vmem:[%s491 + $0xe0] sm:$0xff]
                  %550 = vst [vmem:[%s492 + $0xe0] sm:$0xff] %v549
                  %v551 = vld [vmem:[%s491 + $0xe8] sm:$0xff]
                  %552 = vst [vmem:[%s492 + $0xe8] sm:$0xff] %v551
                  %v553 = vld [vmem:[%s491 + $0xf0] sm:$0xff]
                  %554 = vst [vmem:[%s492 + $0xf0] sm:$0xff] %v553
                  %v555 = vld [vmem:[%s491 + $0xf8] sm:$0xff]
                  %556 = vst [vmem:[%s492 + $0xf8] sm:$0xff] %v555
                  %v557 = vld [vmem:[%s491 + $0xc] sm:$0xff]
                  %558 = vst [vmem:[%s492 + $0x8] sm:$0xff] %v557
                  %v559 = vld [vmem:[%s491 + $0x14] sm:$0xff]
                  %560 = vst [vmem:[%s492 + $0x10] sm:$0xff] %v559
                  %v561 = vld [vmem:[%s491 + $0x1c] sm:$0xff]
                  %562 = vst [vmem:[%s492 + $0x18] sm:$0xff] %v561
                  %v563 = vld [vmem:[%s491 + $0x24] sm:$0xff]
                  %564 = vst [vmem:[%s492 + $0x20] sm:$0xff] %v563
                  %v565 = vld [vmem:[%s491 + $0x2c] sm:$0xff]
                  %566 = vst [vmem:[%s492 + $0x28] sm:$0xff] %v565
                  %v567 = vld [vmem:[%s491 + $0x34] sm:$0xff]
                  %568 = vst [vmem:[%s492 + $0x30] sm:$0xff] %v567
                  %v569 = vld [vmem:[%s491 + $0x3c] sm:$0xff]
                  %570 = vst [vmem:[%s492 + $0x38] sm:$0xff] %v569
                  %v571 = vld [vmem:[%s491 + $0x44] sm:$0xff]
                  %572 = vst [vmem:[%s492 + $0x40] sm:$0xff] %v571
                  %v573 = vld [vmem:[%s491 + $0x4c] sm:$0xff]
                  %574 = vst [vmem:[%s492 + $0x48] sm:$0xff] %v573
                  %v575 = vld [vmem:[%s491 + $0x54] sm:$0xff]
                  %576 = vst [vmem:[%s492 + $0x50] sm:$0xff] %v575
                  %v577 = vld [vmem:[%s491 + $0x5c] sm:$0xff]
                  %578 = vst [vmem:[%s492 + $0x58] sm:$0xff] %v577
                  %v579 = vld [vmem:[%s491 + $0x64] sm:$0xff]
                  %580 = vst [vmem:[%s492 + $0x60] sm:$0xff] %v579
                  %v581 = vld [vmem:[%s491 + $0x6c] sm:$0xff]
                  %582 = vst [vmem:[%s492 + $0x68] sm:$0xff] %v581
                  %v583 = vld [vmem:[%s491 + $0x74] sm:$0xff]
                  %584 = vst [vmem:[%s492 + $0x70] sm:$0xff] %v583
                  %v585 = vld [vmem:[%s491 + $0x7c] sm:$0xff]
                  %586 = vst [vmem:[%s492 + $0x78] sm:$0xff] %v585
                  %v587 = vld [vmem:[%s491 + $0x84] sm:$0xff]
                  %588 = vst [vmem:[%s492 + $0x80] sm:$0xff] %v587
                  %v589 = vld [vmem:[%s491 + $0x8c] sm:$0xff]
                  %590 = vst [vmem:[%s492 + $0x88] sm:$0xff] %v589
                  %v591 = vld [vmem:[%s491 + $0x94] sm:$0xff]
                  %592 = vst [vmem:[%s492 + $0x90] sm:$0xff] %v591
                  %v593 = vld [vmem:[%s491 + $0x9c] sm:$0xff]
                  %594 = vst [vmem:[%s492 + $0x98] sm:$0xff] %v593
                  %v595 = vld [vmem:[%s491 + $0xa4] sm:$0xff]
                  %596 = vst [vmem:[%s492 + $0xa0] sm:$0xff] %v595
                  %v597 = vld [vmem:[%s491 + $0xac] sm:$0xff]
                  %598 = vst [vmem:[%s492 + $0xa8] sm:$0xff] %v597
                  %v599 = vld [vmem:[%s491 + $0xb4] sm:$0xff]
                  %600 = vst [vmem:[%s492 + $0xb0] sm:$0xff] %v599
                  %v601 = vld [vmem:[%s491 + $0xbc] sm:$0xff]
                  %602 = vst [vmem:[%s492 + $0xb8] sm:$0xff] %v601
                  %v603 = vld [vmem:[%s491 + $0xc4] sm:$0xff]
                  %604 = vst [vmem:[%s492 + $0xc0] sm:$0xff] %v603
                  %v605 = vld [vmem:[%s491 + $0xcc] sm:$0xff]
                  %606 = vst [vmem:[%s492 + $0xc8] sm:$0xff] %v605
                  %v607 = vld [vmem:[%s491 + $0xd4] sm:$0xff]
                  %608 = vst [vmem:[%s492 + $0xd0] sm:$0xff] %v607
                  %v609 = vld [vmem:[%s491 + $0xdc] sm:$0xff]
                  %610 = vst [vmem:[%s492 + $0xd8] sm:$0xff] %v609
                  %v611 = vld [vmem:[%s491 + $0xe4] sm:$0xff]
                  %612 = vst [vmem:[%s492 + $0xe0] sm:$0xff] %v611
                  %v613 = vld [vmem:[%s491 + $0xec] sm:$0xff]
                  %614 = vst [vmem:[%s492 + $0xe8] sm:$0xff] %v613
                  %v615 = vld [vmem:[%s491 + $0xf4] sm:$0xff]
                  %616 = vst [vmem:[%s492 + $0xf0] sm:$0xff] %v615
                  %v617 = vld [vmem:[%s491 + $0xfc] sm:$0xff]
                  %618 = vst [vmem:[%s492 + $0xf8] sm:$0xff] %v617
                  %v619 = vld [vmem:[%s491 + $0x104] sm:$0xff]
                  %620 = vst [vmem:[%s492 + $0x100] sm:$0xff] %v619
                  %s621 = sadd.s32 1, %s490
                  %p622 = scmp.ge.s32.totalorder %s621, %s481
                  %s623 = scalar_select %p622, 0, %s621
                  %s624 = smul.u32 %s623, 256
                  %s625 = smul.u32 %s623, 256
                  %s626 = scalar_lea.vmem %s263, %s624
                  %s627 = scalar_lea.vmem %s255, %s625 [#allocation2]
                $region90: #{_lambda_.1} parent=84 // loop_footer
                  %s487 = sadd.s32 %s485, 1
                $region91: #{_lambda_.1} parent=84 // loop_footer_branch
                  %484 = sbr.rel target = $region87
                $region92: #{_lambda_.1} parent=84 // loop_exit
                  _
                %s628 = sshrl.u32 %s480, 5
                %s629 = sand.u32 %s480, 31
                %s630 = smul.u32 %s628, 32
                %s631 = smul.u32 128, %s630
                %s632 = sshra.s32 %s631, 4
                %s633 = scalar_lea.vmem %s263, %s632
                %s634 = smul.u32 128, %s630
                %s635 = sshra.s32 %s634, 4
                %s636 = scalar_lea.vmem %s255, %s635 [#allocation2]
                // While loop
                $region93: #{_lambda_.1} parent=84 // loop_pre_header
                  _
                $region94: #{_lambda_.1} parent=84 // loop_header
                  %s640 = sphi 0, %s642
                  %p641 = scmp.ge.s32.totalorder %s640, %s629
                  %s645 = sphi 0, %s654
                  %s646 = sphi %s633, %s657
                  %s647 = sphi %s636, %s658
                $region95: #{_lambda_.1} parent=84 // loop_header_branch
                  %644 = sbr.rel (%p641) target = $region99
                $region96: #{_lambda_.1} parent=84 // loop_body
                  %v648 = vld [vmem:[%s646] sm:$0xff]
                  %649 = vst [vmem:[%s647] sm:$0xff] %v648
                  %v650 = vld [vmem:[%s646 + $0xc] sm:$0xff]
                  %651 = vst [vmem:[%s647 + $0x8] sm:$0xff] %v650
                  %s652 = sadd.s32 1, %s645
                  %p653 = scmp.ge.s32.totalorder %s652, %s629
                  %s654 = scalar_select %p653, 0, %s652
                  %s655 = smul.u32 %s654, 8
                  %s656 = smul.u32 %s654, 8
                  %s657 = scalar_lea.vmem %s633, %s655
                  %s658 = scalar_lea.vmem %s636, %s656 [#allocation2]
                $region97: #{_lambda_.1} parent=84 // loop_footer
                  %s642 = sadd.s32 %s640, 1
                $region98: #{_lambda_.1} parent=84 // loop_footer_branch
                  %639 = sbr.rel target = $region94
                $region99: #{_lambda_.1} parent=84 // loop_exit
                  _
                %s659 = sshllo.u32 0, %s475
                loop: start=0, step=1, limit=1
                $region100: #{_lambda_.1} parent=84 // loop_pre_header
                  _
                $region101: #{_lambda_.1} parent=84 // loop_header
                  %s661 = sphi 0, %s665
                  %p662 = scmp.ge.s32.totalorder %s661, 1
                  %s666 = sphi %s477, %s477
                  %s667 = sphi %s479, %s479
                $region102: #{_lambda_.1} parent=84 // loop_header_branch
                  %664 = sbr.rel (%p662) target = $region106
                $region103: #{_lambda_.1} parent=84 // loop_body
                  %v668 = vld [vmem:[%s666] sm:%s659]
                  %669 = vst [vmem:[%s667] sm:%s659] %v668
                  %v670 = vld [vmem:[%s666 + $0xc] sm:%s659]
                  %671 = vst [vmem:[%s667 + $0x8] sm:%s659] %v670
                $region104: #{_lambda_.1} parent=84 // loop_footer
                  %s665 = sadd.s32 1, %s661
                $region105: #{_lambda_.1} parent=84 // loop_footer_branch
                  %660 = sbr.rel target = $region101
                $region106: #{_lambda_.1} parent=84 // loop_exit
                  _
              $region85: #{_lambda_.1} parent=51 // pred_fallthru
                _
            $region52: #{_lambda_.1} parent=47 // pred_fallthru
              _
            // Predicated region
            $region53: #{_lambda_.1} parent=47 // pred_check
              %p272 = pneg %p268
            $region54: #{_lambda_.1} parent=47 // pred_check_branch
              %274 = sbr.rel (%p272) target = $region56
            $region55: #{_lambda_.1} parent=47 // pred_region
              %s275 = sshllo.u32 0, %s264
              loop: start=0, step=1, limit=1
              $region57: #{_lambda_.1} parent=55 // loop_pre_header
                _
              $region58: #{_lambda_.1} parent=55 // loop_header
                %s277 = sphi 0, %s281
                %p278 = scmp.ge.s32.totalorder %s277, 1
                %s282 = sphi %s263, %s263
                %s283 = sphi %s255, %s255
              $region59: #{_lambda_.1} parent=55 // loop_header_branch
                %280 = sbr.rel (%p278) target = $region63
              $region60: #{_lambda_.1} parent=55 // loop_body
                %v284 = vld [vmem:[%s282] sm:%s275]
                %285 = vst [vmem:[%s283] sm:%s275] %v284
                %v286 = vld [vmem:[%s282 + $0xc] sm:%s275]
                %287 = vst [vmem:[%s283 + $0x8] sm:%s275] %v286
              $region61: #{_lambda_.1} parent=55 // loop_footer
                %s281 = sadd.s32 1, %s277
              $region62: #{_lambda_.1} parent=55 // loop_footer_branch
                %276 = sbr.rel target = $region58
              $region63: #{_lambda_.1} parent=55 // loop_exit
                _
            $region56: #{_lambda_.1} parent=47 // pred_fallthru
              _
          $region48: #{_lambda_.1} parent=43 // pred_fallthru
            _
          %672 = vnop
        $region44: #{_lambda_.1} parent=39 // pred_fallthru
          _
      $region40: #{_lambda_.1} parent=5 // pred_fallthru
        _
      %p673 = scmp.le.s32.totalorder 1, %s18
      %p674 = scmp.lt.s32.totalorder %s18, 3
      %p675 = pnand %p673, %p674
      %p676 = pneg %p675
      // Predicated region
      $region107: #{_lambda_.1} parent=5 // pred_check
        _
      $region108: #{_lambda_.1} parent=5 // pred_check_branch
        %678 = sbr.rel (%p675) target = $region110
      $region109: #{_lambda_.1} parent=5 // pred_region
        %s679 = ssub.s32 %s18, 1
        %s680 = sand.u32 %s31, 1
        %s681 = sand.u32 %s31, 1
        %s682 = smul.addr %s681, 16
        %s683 = scalar_lea.vmem [#allocation2], %s682
        // Predicated region
        $region111: #{_lambda_.1} parent=109 // pred_check
          %p684 = pneg %p44
        $region112: #{_lambda_.1} parent=109 // pred_check_branch
          %686 = sbr.rel (%p684) target = $region114
        $region113: #{_lambda_.1} parent=109 // pred_region
          _
        $region114: #{_lambda_.1} parent=109 // pred_fallthru
          _
        // Predicated region
        $region115: #{_lambda_.1} parent=109 // pred_check
          %p687 = pneg %p149
        $region116: #{_lambda_.1} parent=109 // pred_check_branch
          %689 = sbr.rel (%p687) target = $region118
        $region117: #{_lambda_.1} parent=109 // pred_region
          %690 = dma.done [#allocation4], 64
        $region118: #{_lambda_.1} parent=109 // pred_fallthru
          _
        // Predicated region
        $region119: #{_lambda_.1} parent=109 // pred_check
          %p691 = pneg %p170
        $region120: #{_lambda_.1} parent=109 // pred_check_branch
          %693 = sbr.rel (%p691) target = $region122
        $region121: #{_lambda_.1} parent=109 // pred_region
          %694 = dma.done [#allocation7], 128
        $region122: #{_lambda_.1} parent=109 // pred_fallthru
          _
        %s695 = sand.u32 %s31, 1
        %s696 = sand.u32 %s31, 1
        %s697 = smul.addr %s696, 16
        %s698 = scalar_lea.vmem [#allocation2], %s697
        %p699 = pneg %p44
        %p700 = pneg %p41
        %p701 = pneg %p65
        %p702 = pneg %p62
        %p703 = pneg %p86
        %p704 = pneg %p83
        %p705 = pneg %p107
        %p706 = pneg %p104
        %p707 = pneg %p128
        %p708 = pneg %p125
        %p709 = pneg %p149
        %p710 = pneg %p146
        %p711 = pneg %p170
        %p712 = pneg %p167
        %p713 = pneg %p196
        %p714 = pneg %p193
        %s715 = sand.u32 %s183, 1
        %s716 = scalar_lea.sflag [#allocation5], %s715
        %s717 = sand.u32 %s183, 1
        %s718 = smul.addr %s717, 16
        %s719 = scalar_lea.vmem [#allocation8], %s718
        %s720 = smul.u32 2, %s23
        %s721 = ssub.s32 3, %s720
        %p722 = scmp.lt.s32.totalorder %s721, 2
        %s723 = scalar_select %p722, %s721, 2
        %s724 = smul.u32 128, %s723
        %s725 = smul.u32 2, %s23
        %s726 = ssub.s32 3, %s725
        %p727 = scmp.lt.s32.totalorder %s726, 2
        %s728 = scalar_select %p727, %s726, 2
        %s729 = smul.u32 128, %s728
        %v731 = vld [vmem:[%s683] sm:$0xff]
        %v732 = vld [vmem:[%s683 + $0x8] sm:$0xff]
        %v733 = vld [vmem:[%s1] sm:$0xf]
        %v734 = vld [vmem:[%s1 + $0x4] sm:$0xf]
        %v735 = vld [vmem:[%s1 + $0x8] sm:$0xf]
        %v736 = vld [vmem:[%s1 + $0xc] sm:$0xf]
        %v737 = vld [vmem:[%s2] sm:$0xff]
        %v738 = vld [vmem:[%s2 + $0x8] sm:$0xff]
        %v739 = vld [vmem:[%s2 + $0x10] sm:$0xff]
        %v740 = vld [vmem:[%s2 + $0x18] sm:$0xff]
        %742 = vset.pattern.permute.xlu0 0
        %743 = vperm.xlu0 %742, %v737
        %v744 = vpop.permute.xlu0 %743
        %747 = vset.pattern.permute.xlu0 0
        %748 = vperm.xlu0 %747, %v738
        %v749 = vpop.permute.xlu0 %748
        %752 = vset.pattern.permute.xlu0 0
        %753 = vperm.xlu0 %752, %v739
        %v754 = vpop.permute.xlu0 %753
        %757 = vset.pattern.permute.xlu0 0
        %758 = vperm.xlu0 %757, %v740
        %v759 = vpop.permute.xlu0 %758
        %v765 = vunpack.c.l.b16 %v733
        %v766 = vunpack.c.l.b16 %v734
        %v767 = vunpack.c.l.b16 %v735
        %v768 = vunpack.c.l.b16 %v736
        %v769 = vpack.c.b16 %v766, %v765
        %v770 = vpack.c.b16 %v768, %v767
        %v773 = vunpack.c.l.b16 %v731
        %v774 = vunpack.c.h.b16 %v731
        %v775 = vunpack.c.l.b16 %v732
        %v776 = vunpack.c.h.b16 %v732
        %v777 = vpack.c.b16 %v775, %v773
        %v778 = vpack.c.b16 %v776, %v774
        %vm781 = vcmask 130048
        %v783 = vsel %vm781, %v769, 0
        %v786 = vsel %vm781, %v770, 0
        %788 = vmatprep.subr.bf16.mxu0 %v778
        %789 = vmatpush1.bf16.msra.mxu0 %v777
        %790 = vmatprep.subr.bf16.mxu0 0
        %791 = vmatpush1.bf16.msra.mxu0 0
        %792 = vmatprep.subr.bf16.mxu0 0
        %793 = vmatpush1.bf16.msra.mxu0 0
        %794 = vmatprep.subr.bf16.mxu0 0
        %795 = vmatpush1.bf16.msra.mxu0 0
        %796 = vmatprep.subr.bf16.mxu0 0
        %797 = vmatpush1.bf16.msra.mxu0 0
        %798 = vmatprep.subr.bf16.mxu0 0
        %799 = vmatpush1.bf16.msra.mxu0 0
        %800 = vmatprep.subr.bf16.mxu0 0
        %801 = vmatpush1.bf16.msra.mxu0 0
        %802 = vmatprep.subr.bf16.mxu0 0
        %803 = vmatpush1.bf16.msra.mxu0 0
        %804 = vmatprep.subr.bf16.mxu0 0
        %805 = vmatpush1.bf16.msra.mxu0 0
        %806 = vmatprep.subr.bf16.mxu0 0
        %807 = vmatpush1.bf16.msra.mxu0 0
        %808 = vmatprep.subr.bf16.mxu0 0
        %809 = vmatpush1.bf16.msra.mxu0 0
        %810 = vmatprep.subr.bf16.mxu0 0
        %811 = vmatpush1.bf16.msra.mxu0 0
        %812 = vmatprep.subr.bf16.mxu0 0
        %813 = vmatpush1.bf16.msra.mxu0 0
        %814 = vmatprep.subr.bf16.mxu0 0
        %815 = vmatpush1.bf16.msra.mxu0 0
        %816 = vmatprep.subr.bf16.mxu0 0
        %817 = vmatpush1.bf16.msra.mxu0 0
        %818 = vmatprep.subr.bf16.mxu0 0
        %819 = vmatpush1.bf16.msra.mxu0 0
        %820 = vmatprep.mubr.bf16.mxu0 0
        %821 = vmatmul.mubr.bf16.gmra.mrb[0].mxu0 %v783
        %v822 = vpop.f32.mrb[0].mxu0
        %v823 = vadd.f32 %v744, %v822
        %v824 = vpop.f32.mrb[0].mxu0
        %v825 = vadd.f32 %v744, %v824
        %v826 = vpop.f32.mrb[0].mxu0
        %v827 = vadd.f32 %v749, %v826
        %v828 = vpop.f32.mrb[0].mxu0
        %v829 = vadd.f32 %v749, %v828
        %830 = vmatprep.mubr.bf16.mxu0 0
        %831 = vmatmul.mubr.bf16.gmra.mrb[0].mxu0 %v786
        %v832 = vpop.f32.mrb[0].mxu0
        %v833 = vadd.f32 %v754, %v832
        %v834 = vpop.f32.mrb[0].mxu0
        %v835 = vadd.f32 %v754, %v834
        %v836 = vpop.f32.mrb[0].mxu0
        %v837 = vadd.f32 %v759, %v836
        %v838 = vpop.f32.mrb[0].mxu0
        %v839 = vadd.f32 %v759, %v838
        %840 = vdwg.mxu0
        %v841 = vmax.f32 %v823, 0.0
        %v842 = vmax.f32 %v825, 0.0
        %v843 = vmax.f32 %v827, 0.0
        %v844 = vmax.f32 %v829, 0.0
        %v845 = vmax.f32 %v833, 0.0
        %v846 = vmax.f32 %v835, 0.0
        %v847 = vmax.f32 %v837, 0.0
        %v848 = vmax.f32 %v839, 0.0
        %v849 = vpack.c.bf16 %v843, %v841
        %v850 = vpack.c.bf16 %v844, %v842
        %v851 = vpack.c.bf16 %v847, %v845
        %v852 = vpack.c.bf16 %v848, %v846
        %v853 = vld [vmem:[%s3] sm:$0xf]
        %v854 = vld [vmem:[%s3 + $0x4] sm:$0xf]
        %v855 = vld [vmem:[%s3 + $0x8] sm:$0xf]
        %v856 = vld [vmem:[%s3 + $0xc] sm:$0xf]
        %v857 = vld [vmem:[%s4] sm:$0xff]
        %v858 = vld [vmem:[%s4 + $0x8] sm:$0xff]
        %v859 = vld [vmem:[%s4 + $0x10] sm:$0xff]
        %v860 = vld [vmem:[%s4 + $0x18] sm:$0xff]
        %862 = vset.pattern.permute.xlu0 0
        %863 = vperm.xlu0 %862, %v857
        %v864 = vpop.permute.xlu0 %863
        %867 = vset.pattern.permute.xlu0 0
        %868 = vperm.xlu0 %867, %v858
        %v869 = vpop.permute.xlu0 %868
        %872 = vset.pattern.permute.xlu0 0
        %873 = vperm.xlu0 %872, %v859
        %v874 = vpop.permute.xlu0 %873
        %877 = vset.pattern.permute.xlu0 0
        %878 = vperm.xlu0 %877, %v860
        %v879 = vpop.permute.xlu0 %878
        %v885 = vunpack.c.l.b16 %v853
        %v886 = vunpack.c.l.b16 %v854
        %v887 = vunpack.c.l.b16 %v855
        %v888 = vunpack.c.l.b16 %v856
        %v889 = vpack.c.b16 %v886, %v885
        %v890 = vpack.c.b16 %v888, %v887
        %vm891 = vcmask 261120
        %v893 = vsel %vm891, %v889, 0
        %v896 = vsel %vm891, %v890, 0
        %898 = vmatprep.subr.bf16.mxu0 %v850
        %899 = vmatpush1.bf16.msra.mxu0 %v849
        %900 = vmatprep.subr.bf16.mxu0 %v852
        %901 = vmatpush1.bf16.msra.mxu0 %v851
        %902 = vmatprep.subr.bf16.mxu0 0
        %903 = vmatpush1.bf16.msra.mxu0 0
        %904 = vmatprep.subr.bf16.mxu0 0
        %905 = vmatpush1.bf16.msra.mxu0 0
        %906 = vmatprep.subr.bf16.mxu0 0
        %907 = vmatpush1.bf16.msra.mxu0 0
        %908 = vmatprep.subr.bf16.mxu0 0
        %909 = vmatpush1.bf16.msra.mxu0 0
        %910 = vmatprep.subr.bf16.mxu0 0
        %911 = vmatpush1.bf16.msra.mxu0 0
        %912 = vmatprep.subr.bf16.mxu0 0
        %913 = vmatpush1.bf16.msra.mxu0 0
        %914 = vmatprep.subr.bf16.mxu0 0
        %915 = vmatpush1.bf16.msra.mxu0 0
        %916 = vmatprep.subr.bf16.mxu0 0
        %917 = vmatpush1.bf16.msra.mxu0 0
        %918 = vmatprep.subr.bf16.mxu0 0
        %919 = vmatpush1.bf16.msra.mxu0 0
        %920 = vmatprep.subr.bf16.mxu0 0
        %921 = vmatpush1.bf16.msra.mxu0 0
        %922 = vmatprep.subr.bf16.mxu0 0
        %923 = vmatpush1.bf16.msra.mxu0 0
        %924 = vmatprep.subr.bf16.mxu0 0
        %925 = vmatpush1.bf16.msra.mxu0 0
        %926 = vmatprep.subr.bf16.mxu0 0
        %927 = vmatpush1.bf16.msra.mxu0 0
        %928 = vmatprep.subr.bf16.mxu0 0
        %929 = vmatpush1.bf16.msra.mxu0 0
        %930 = vmatprep.mubr.bf16.mxu0 0
        %931 = vmatmul.mubr.bf16.gmra.mrb[0].mxu0 %v893
        %v932 = vpop.f32.mrb[0].mxu0
        %v933 = vadd.f32 %v864, %v932
        %v934 = vpop.f32.mrb[0].mxu0
        %v935 = vadd.f32 %v864, %v934
        %v936 = vpop.f32.mrb[0].mxu0
        %v937 = vadd.f32 %v869, %v936
        %v938 = vpop.f32.mrb[0].mxu0
        %v939 = vadd.f32 %v869, %v938
        %940 = vmatprep.mubr.bf16.mxu0 0
        %941 = vmatmul.mubr.bf16.gmra.mrb[0].mxu0 %v896
        %v942 = vpop.f32.mrb[0].mxu0
        %v943 = vadd.f32 %v874, %v942
        %v944 = vpop.f32.mrb[0].mxu0
        %v945 = vadd.f32 %v874, %v944
        %v946 = vpop.f32.mrb[0].mxu0
        %v947 = vadd.f32 %v879, %v946
        %v948 = vpop.f32.mrb[0].mxu0
        %v949 = vadd.f32 %v879, %v948
        %950 = vdwg.mxu0
        %v951 = vmax.f32 %v933, 0.0
        %v952 = vmax.f32 %v935, 0.0
        %v953 = vmax.f32 %v937, 0.0
        %v954 = vmax.f32 %v939, 0.0
        %v955 = vmax.f32 %v943, 0.0
        %v956 = vmax.f32 %v945, 0.0
        %v957 = vmax.f32 %v947, 0.0
        %v958 = vmax.f32 %v949, 0.0
        %v959 = vpack.c.bf16 %v953, %v951
        %v960 = vpack.c.bf16 %v954, %v952
        %v961 = vpack.c.bf16 %v957, %v955
        %v962 = vpack.c.bf16 %v958, %v956
        %v963 = vld [vmem:[#allocation3] sm:$0xf]
        %v964 = vld [vmem:[#allocation6] sm:$0xff]
        %966 = vset.pattern.permute.xlu0 0
        %967 = vperm.xlu0 %966, %v964
        %v968 = vpop.permute.xlu0 %967
        %v971 = vsel %vm891, %v963, 0
        %973 = vmatprep.subr.bf16.mxu0 %v960
        %974 = vmatpush1.bf16.msra.mxu0 %v959
        %975 = vmatprep.subr.bf16.mxu0 %v962
        %976 = vmatpush1.bf16.msra.mxu0 %v961
        %977 = vmatprep.subr.bf16.mxu0 0
        %978 = vmatpush1.bf16.msra.mxu0 0
        %979 = vmatprep.subr.bf16.mxu0 0
        %980 = vmatpush1.bf16.msra.mxu0 0
        %981 = vmatprep.subr.bf16.mxu0 0
        %982 = vmatpush1.bf16.msra.mxu0 0
        %983 = vmatprep.subr.bf16.mxu0 0
        %984 = vmatpush1.bf16.msra.mxu0 0
        %985 = vmatprep.subr.bf16.mxu0 0
        %986 = vmatpush1.bf16.msra.mxu0 0
        %987 = vmatprep.subr.bf16.mxu0 0
        %988 = vmatpush1.bf16.msra.mxu0 0
        %989 = vmatprep.subr.bf16.mxu0 0
        %990 = vmatpush1.bf16.msra.mxu0 0
        %991 = vmatprep.subr.bf16.mxu0 0
        %992 = vmatpush1.bf16.msra.mxu0 0
        %993 = vmatprep.subr.bf16.mxu0 0
        %994 = vmatpush1.bf16.msra.mxu0 0
        %995 = vmatprep.subr.bf16.mxu0 0
        %996 = vmatpush1.bf16.msra.mxu0 0
        %997 = vmatprep.subr.bf16.mxu0 0
        %998 = vmatpush1.bf16.msra.mxu0 0
        %999 = vmatprep.subr.bf16.mxu0 0
        %1000 = vmatpush1.bf16.msra.mxu0 0
        %1001 = vmatprep.subr.bf16.mxu0 0
        %1002 = vmatpush1.bf16.msra.mxu0 0
        %1003 = vmatprep.subr.bf16.mxu0 0
        %1004 = vmatpush1.bf16.msra.mxu0 0
        %1005 = vmatprep.mubr.bf16.mxu0 0
        %1006 = vmatmul.mubr.bf16.gmra.mrb[0].mxu0 %v971
        %v1007 = vpop.f32.mrb[0].mxu0
        %v1008 = vadd.f32 %v968, %v1007
        %v1009 = vpop.f32.mrb[0].mxu0
        %v1010 = vadd.f32 %v968, %v1009
        %v1011 = vpop.f32.mrb[0].mxu0
        %v1012 = vpop.f32.mrb[0].mxu0
        %1013 = vdwg.mxu0
        %1014 = vst [vmem:[%s719] sm:$0xff] %v1008
        %1015 = vst [vmem:[%s719 + $0x8] sm:$0xff] %v1010
        %s1016 = sand.u32 %s183, 1
        %s1017 = scalar_lea.sflag [#allocation5], %s1016
        %s1018 = sand.u32 %s183, 1
        %s1019 = smul.addr %s1018, 16
        %s1020 = scalar_lea.vmem [#allocation8], %s1019
        // Predicated region
        $region123: #{_lambda_.1} parent=109 // pred_check
          %p1021 = pneg %p193
        $region124: #{_lambda_.1} parent=109 // pred_check_branch
          %1023 = sbr.rel (%p1021) target = $region126
        $region125: #{_lambda_.1} parent=109 // pred_region
          %s1024 = smul.u32 2, %s23
          %s1025 = ssub.s32 3, %s1024
          %p1026 = scmp.lt.s32.totalorder %s1025, 2
          %s1027 = scalar_select %p1026, %s1025, 2
          %s1028 = smul.u32 128, %s1027
          %s1030 = ssub.s32 256, %s1028
          %1031 = vsyncadd %s1017, %s1030
          %p1032 = scmp.ne.s32.totalorder 0, %s1028
          %s1033 = smul.addr %s1024, 128
          %s1034 = scalar_lea.hbm %s7, %s1033
          %s1035 = smul.u32 %s1027, 8
          %s1036 = sshll.u32 %s1035, 4
          %s1037 = sshll.u32 %s1020, 4
          %s1038 = int_to_ptr.vmem [resolvable:$true] %s1037
          %1040 = dma.vmem_to_hbm [thread:$0]  (%p1032), %s1038, %s1036, %s1034, %s1017
        $region126: #{_lambda_.1} parent=109 // pred_fallthru
          _
      $region110: #{_lambda_.1} parent=5 // pred_fallthru
        _
      %p1041 = scmp.le.s32.totalorder 2, %s18
      // Predicated region
      $region127: #{_lambda_.1} parent=5 // pred_check
        %p1042 = pneg %p1041
      $region128: #{_lambda_.1} parent=5 // pred_check_branch
        %1044 = sbr.rel (%p1042) target = $region130
      $region129: #{_lambda_.1} parent=5 // pred_region
        %s1045 = ssub.s32 %s18, 2
        // Predicated region
        $region131: #{_lambda_.1} parent=129 // pred_check
          %p1046 = pneg %p199
        $region132: #{_lambda_.1} parent=129 // pred_check_branch
          %1048 = sbr.rel (%p1046) target = $region134
        $region133: #{_lambda_.1} parent=129 // pred_region
          %s1049 = sand.u32 %s184, 1
          %s1050 = scalar_lea.sflag [#allocation5], %s1049
          %s1051 = sand.u32 %s184, 1
          %s1052 = smul.addr %s1051, 16
          %s1053 = scalar_lea.vmem [#allocation8], %s1052
          %1054 = dma.done %s1050, 256
        $region134: #{_lambda_.1} parent=129 // pred_fallthru
          _
      $region130: #{_lambda_.1} parent=5 // pred_fallthru
        _
    $region6: #{_lambda_.1} parent=1 // loop_footer
      %s22 = sadd.s32 1, %s18
    $region7: #{_lambda_.1} parent=1 // loop_footer_branch
      %17 = sbr.rel target = $region3
    $region8: #{_lambda_.1} parent=1 // loop_exit
      _
    %1055 = vsyncpa [#allocation4], 1
    %s1056 = scalar_lea.sflag [#allocation4], 1
    %1057 = vsyncpa %s1056, 1
    %1058 = vsyncpa [#allocation7], 1
    %1059 = vsyncpa [#allocation5], 1
    %s1060 = scalar_lea.sflag [#allocation5], 1
    %1061 = vsyncpa %s1060, 1

</llo_original>
